<compile_context>
chip_gen: v7x
topology: tpu7x:2x2x1
jax: 0.10.0
libtpu: 0.0.40
codegen_flags: <defaults>
</compile_context>

<pallas_src>
import jax
import jax.numpy as jnp
from jax.experimental import pallas as pl
from jax.experimental.pallas import tpu as pltpu

BATCH = 8
IN_FEATURES = 32
OUT_FEATURES = 32
LANE = 128  # pack LANE // IN_FEATURES batch rows per 128-lane row


def _round_up(x, m):
    return ((x + m - 1) // m) * m


def _autocast_linear_kernel(x_ref, w_ref, b_ref, o_ref):
    # --- autocast(True) region: bf16 operands, fp32 MXU accumulation ---
    x_bf16 = x_ref[...].astype(jnp.bfloat16)          # x arrives f32 from upstream
    acc = jnp.dot(x_bf16, w_ref[...],                  # w already bf16 at rest
                  preferred_element_type=jnp.float32)
    # Bias added in the fp32 epilogue, then a SINGLE rounding to bf16
    # (the autocast Linear's output dtype).
    y_bf16 = (acc + b_ref[...].astype(jnp.float32)).astype(jnp.bfloat16)
    # --- AutocastModule: cast result back to float32 ---
    o_ref[...] = y_bf16.astype(jnp.float32)


def prepare_params(w_f32, b_f32, pack):
    """Build a block-diagonal bf16 weight [pack*IN, pack*OUT] (pack diagonal
    copies of W) and a pack-times-tiled bf16 bias [1, pack*OUT], once,
    'bf16 at rest'."""
    w_bd = jnp.kron(jnp.eye(pack, dtype=w_f32.dtype), w_f32)       # (pack*IN, pack*OUT)
    b_t = jnp.tile(jnp.reshape(b_f32, (1, -1)), (1, pack))          # (1, pack*OUT)
    return w_bd.astype(jnp.bfloat16), b_t.astype(jnp.bfloat16)


def autocast_linear(x, w_packed, b_packed, in_features, out_features,
                    *, block_rows=8192):
    """x: [B, IN] f32, w_packed: [pack*IN, pack*OUT] bf16,
    b_packed: [1, pack*OUT] bf16 -> [B, out_features] f32.

    block_rows is the (approximate) number of *batch* rows per grid step.
    """
    B, IN = x.shape
    assert IN == in_features and LANE % in_features == 0
    pack = LANE // in_features
    kp, op = w_packed.shape
    assert kp == pack * in_features and op == pack * out_features
    assert b_packed.shape == (1, op)

    # --- choose the packed-row tile ---
    rows = -(-B // pack)                 # packed rows needed
    rows = _round_up(rows, 8)            # sublane alignment

    tb = max(8, min(_round_up(max(block_rows // pack, 8), 8), rows))
    if rows >= 16:
        # >= 2 grid steps whenever there is enough work, so both v7x
        # TensorCores get fed via the "parallel" axis (harmless on v5e/v6e).
        tb = min(tb, _round_up(pl.cdiv(rows, 2), 8))
    total = _round_up(rows, tb)

    # --- pack x: [B,32] -> [total, pack*IN] (contiguous reshape, padded rows are zeros) ---
    pad_batch_rows = total * pack - B
    if pad_batch_rows:
        x = jnp.pad(x, ((0, pad_batch_rows), (0, 0)))
    x_packed = x.reshape(total, kp)

    grid = (total // tb,)

    # Double-buffered VMEM footprint: x + out tiles (f32), weight + bias (bf16).
    vmem_bytes = (2 * tb * kp * 4) + (2 * tb * op * 4) \
        + 2 * (kp * op * 2) + 2 * (op * 2) + (1 << 20)
    vmem_limit = int(min(max(vmem_bytes, 16 << 20), 32 << 20))

    out = pl.pallas_call(
        _autocast_linear_kernel,
        out_shape=jax.ShapeDtypeStruct((total, op), jnp.float32),
        grid_spec=pltpu.PrefetchScalarGridSpec(
            num_scalar_prefetch=0,
            grid=grid,
            in_specs=[
                # x: one packed batch tile per grid step (full-lane, unmasked)
                pl.BlockSpec((tb, kp), lambda i: (i, 0)),
                # weight / bias: same block every step -> VMEM-resident across grid
                pl.BlockSpec((kp, op), lambda i: (0, 0)),
                pl.BlockSpec((1, op), lambda i: (0, 0)),
            ],
            out_specs=pl.BlockSpec((tb, op), lambda i: (i, 0)),
        ),
        compiler_params=pltpu.CompilerParams(
            dimension_semantics=("parallel",),
            vmem_limit_bytes=vmem_limit),
    )(x_packed, w_packed, b_packed)

    # Unpack: [total, pack*OUT] -> [total*pack, OUT] (free reshape), drop pad rows.
    out = out.reshape(total * pack, out_features)
    return out[:B]


if __name__ == "__main__":
    key = jax.random.PRNGKey(0)
    kx, kw, kb = jax.random.split(key, 3)

    # Deterministic parameter init (mimicking nn.Linear's uniform init bounds)
    bound = 1.0 / (IN_FEATURES ** 0.5)
    x = jax.random.normal(kx, (BATCH, IN_FEATURES), dtype=jnp.float32)
    w = jax.random.uniform(kw, (IN_FEATURES, OUT_FEATURES),
                           minval=-bound, maxval=bound, dtype=jnp.float32)
    b = jax.random.uniform(kb, (OUT_FEATURES,),
                           minval=-bound, maxval=bound, dtype=jnp.float32)

    # Pack / cast parameters once ("bf16 at rest"), not per kernel call.
    pack = LANE // IN_FEATURES
    w_packed, b_packed = prepare_params(w, b, pack)

    out = autocast_linear(x, w_packed, b_packed, IN_FEATURES, OUT_FEATURES)
    jax.block_until_ready(out)

    assert out.shape == (BATCH, OUT_FEATURES)
    assert out.dtype == jnp.float32

    # Reference: bf16 autocast emulation in plain JAX (fp32 accumulate,
    # bias in fp32 epilogue, single rounding to bf16), cast back to f32.
    acc_ref = jnp.dot(x.astype(jnp.bfloat16), w.astype(jnp.bfloat16),
                      preferred_element_type=jnp.float32)
    ref = (acc_ref + b.astype(jnp.bfloat16).astype(jnp.float32)
           ).astype(jnp.bfloat16).astype(jnp.float32)
    assert jnp.allclose(out, ref, atol=1e-2, rtol=1e-2)

    print("KERNEL_OK")
</pallas_src>

<mosaic_0001>
module attributes {stable_mosaic.version = 11 : i64} {
  func.func @_autocast_linear_kernel(%arg0: i32, %arg1: memref<8x128xf32, #tpu.memory_space<vmem>>, %arg2: memref<128x128xbf16, #tpu.memory_space<vmem>>, %arg3: memref<1x128xbf16, #tpu.memory_space<vmem>>, %arg4: memref<8x128xf32, #tpu.memory_space<vmem>>) attributes {dimension_semantics = [#tpu.dimension_semantics<parallel>], iteration_bounds = array<i64: 1>, scalar_prefetch = 0 : i64, scratch_operands = 0 : i64, tpu.core_type = #tpu.core_type<tc>, window_params = [{transform_indices = @transform_0, window_bounds = array<i64: 8, 128>}, {pipeline_mode = #tpu.pipeline_mode<synchronous>, transform_indices = @transform_1, window_bounds = array<i64: 128, 128>}, {pipeline_mode = #tpu.pipeline_mode<synchronous>, transform_indices = @transform_2, window_bounds = array<i64: 1, 128>}, {transform_indices = @transform_3, window_bounds = array<i64: 8, 128>}]} {
    %c0 = arith.constant 0 : index
    %c0_0 = arith.constant 0 : index
    %0 = vector.load %arg1[%c0, %c0_0] : memref<8x128xf32, #tpu.memory_space<vmem>>, vector<8x128xf32>
    %1 = arith.truncf %0 : vector<8x128xf32> to vector<8x128xbf16>
    %c0_1 = arith.constant 0 : index
    %c0_2 = arith.constant 0 : index
    %2 = vector.load %arg2[%c0_1, %c0_2] : memref<128x128xbf16, #tpu.memory_space<vmem>>, vector<128x128xbf16>
    %cst = arith.constant dense<0.000000e+00> : vector<8x128xf32>
    %3 = tpu.matmul %1, %2, %cst {dimension_numbers = #tpu.dot_dimension_numbers<[1], [0], [0], [1], [0, 0, 1, 1], [], []>} : vector<8x128xbf16>, vector<128x128xbf16>, vector<8x128xf32> -> vector<8x128xf32>
    %c0_3 = arith.constant 0 : index
    %c0_4 = arith.constant 0 : index
    %4 = vector.load %arg3[%c0_3, %c0_4] : memref<1x128xbf16, #tpu.memory_space<vmem>>, vector<1x128xbf16>
    %5 = arith.extf %4 : vector<1x128xbf16> to vector<1x128xf32>
    %6 = vector.broadcast %5 : vector<1x128xf32> to vector<8x128xf32>
    %7 = arith.addf %3, %6 : vector<8x128xf32>
    %8 = arith.truncf %7 : vector<8x128xf32> to vector<8x128xbf16>
    %9 = arith.extf %8 : vector<8x128xbf16> to vector<8x128xf32>
    %c0_5 = arith.constant 0 : index
    %c0_6 = arith.constant 0 : index
    %10 = vector.load %arg4[%c0_5, %c0_6] : memref<8x128xf32, #tpu.memory_space<vmem>>, vector<8x128xf32>
    tpu.vector_store %arg4[%c0_5, %c0_6], %9 {strides = array<i32>} : memref<8x128xf32, #tpu.memory_space<vmem>>, vector<8x128xf32>,
    return
  }
  func.func @transform_0(%arg0: i32) -> (i32, i32) {
    %c0_i32 = arith.constant 0 : i32
    %c0_i32_0 = arith.constant 0 : i32
    return %arg0, %c0_i32 : i32, i32
  }
  func.func @transform_1(%arg0: i32) -> (i32, i32) {
    %c0_i32 = arith.constant 0 : i32
    %c0_i32_0 = arith.constant 0 : i32
    %c0_i32_1 = arith.constant 0 : i32
    return %c0_i32, %c0_i32_0 : i32, i32
  }
  func.func @transform_2(%arg0: i32) -> (i32, i32) {
    %c0_i32 = arith.constant 0 : i32
    %c0_i32_0 = arith.constant 0 : i32
    %c0_i32_1 = arith.constant 0 : i32
    return %c0_i32, %c0_i32_0 : i32, i32
  }
  func.func @transform_3(%arg0: i32) -> (i32, i32) {
    %c0_i32 = arith.constant 0 : i32
    %c0_i32_0 = arith.constant 0 : i32
    return %arg0, %c0_i32 : i32, i32
  }
}

</mosaic_0001>

<llo_original>
// kernel: tpu_custom_call.1
$region0: #{tpu_custom_call.1}
  #allocation0 [shape = 'u32[]', space=smem, size = 0x4, offset = 0x4, fixed_abs, tag = 'smem constant byte address 0x4 - core index']
  #allocation1 [shape = 'u32[144,128]{1,0:T(1,128)}', space=vmem, size = 0x12000, scoped, tag = 'internal scratch']
  %s0 = inlined_call_operand.hbm [shape: f32[8,128], index: 0, kind: input, shape index: {}]
  %s1 = inlined_call_operand.hbm [shape: bf16[128,128], index: 1, kind: input, shape index: {}]
  %s2 = inlined_call_operand.vmem [shape: bf16[1,128], index: 2, kind: input, shape index: {}]
  %s3 = inlined_call_operand.hbm [shape: f32[8,128], index: 3, kind: output, shape index: {}]
  %s4 = sld [smem:[#allocation0]]
  $region30: #{tpu_custom_call.1} parent=0
    _
  %s6 = ssub.s32 1, %s4
  %s7 = scalar_select 0, %s6, %s4
  $region1: #{tpu_custom_call.1} parent=0
    #allocation2 [shape = 'u8[4096]{0}', space=vmem, size = 0x1000, scoped, tag = 'input window, operand 0, single buffered']
    #allocation3 [shape = 's32[1]{0}', space=sflag, size = 0x4, scoped, tag = 'scoped memory for tpu_custom_call.1']
    #allocation4 [shape = 's32[1]{0}', space=sflag, size = 0x4, scoped, tag = 'scoped memory for tpu_custom_call.1']
    #allocation5 [shape = 'u8[32768]{0}', space=vmem, size = 0x8000, scoped, tag = 'input window, operand 1, single buffered']
    #allocation6 [shape = 's32[1]{0}', space=sflag, size = 0x4, scoped, tag = 'scoped memory for tpu_custom_call.1']
    #allocation7 [shape = 'u8[4096]{0}', space=vmem, size = 0x1000, scoped, tag = 'output window, operand 0, single buffered']
    %8 = vsyncpa [#allocation3], 0
    %9 = vsyncpa [#allocation6], 0
    %10 = vsyncpa [#allocation4], 0
    // Predicated region
    $region2: #{tpu_custom_call.1} parent=1 // pred_check
      _
    $region3: #{tpu_custom_call.1} parent=1 // pred_check_branch
      %12 = sbr.rel (0) target = $region5
    $region4: #{tpu_custom_call.1} parent=1 // pred_region
      %s14 = ssub.s32 128, 128
      %15 = vsyncadd [#allocation3], %s14
      %s17 = sshll.u32 [#allocation2], 4
      %s18 = int_to_ptr.vmem [resolvable:$true] %s17
      %20 = dma.hbm_to_vmem [thread:$0]  %s0, 128, %s18, [#allocation3]
    $region5: #{tpu_custom_call.1} parent=1 // pred_fallthru
      _
    // Predicated region
    $region6: #{tpu_custom_call.1} parent=1 // pred_check
      _
    $region7: #{tpu_custom_call.1} parent=1 // pred_check_branch
      %22 = sbr.rel (0) target = $region9
    $region8: #{tpu_custom_call.1} parent=1 // pred_region
      %s24 = ssub.s32 1024, 1024
      %25 = vsyncadd [#allocation6], %s24
      %s26 = sshll.u32 [#allocation5], 4
      %s27 = int_to_ptr.vmem [resolvable:$true] %s26
      %32 = dma.hbm_to_vmem [thread:$0]  %s1, 1024, %s27, [#allocation6], 64, 64, 4
    $region9: #{tpu_custom_call.1} parent=1 // pred_fallthru
      _
    // Predicated region
    $region10: #{tpu_custom_call.1} parent=1 // pred_check
      _
    $region11: #{tpu_custom_call.1} parent=1 // pred_check_branch
      %34 = sbr.rel (0) target = $region13
    $region12: #{tpu_custom_call.1} parent=1 // pred_region
      _
    $region13: #{tpu_custom_call.1} parent=1 // pred_fallthru
      _
    // Predicated region
    $region14: #{tpu_custom_call.1} parent=1 // pred_check
      _
    $region15: #{tpu_custom_call.1} parent=1 // pred_check_branch
      %36 = sbr.rel (0) target = $region17
    $region16: #{tpu_custom_call.1} parent=1 // pred_region
      %37 = dma.done [#allocation3], 128
    $region17: #{tpu_custom_call.1} parent=1 // pred_fallthru
      _
    // Predicated region
    $region18: #{tpu_custom_call.1} parent=1 // pred_check
      _
    $region19: #{tpu_custom_call.1} parent=1 // pred_check_branch
      %39 = sbr.rel (0) target = $region21
    $region20: #{tpu_custom_call.1} parent=1 // pred_region
      %40 = dma.done [#allocation6], 1024
    $region21: #{tpu_custom_call.1} parent=1 // pred_fallthru
      _
    %v42 = vld [vmem:[#allocation2] sm:$0xff]
    %v43 = vpack.c.bf16 %v42, %v42
    %v44 = vld [vmem:[#allocation5] sm:$0xf]
    %v45 = vld [vmem:[#allocation5 + $0x4] sm:$0xf]
    %v46 = vld [vmem:[#allocation5 + $0x8] sm:$0xf]
    %v47 = vld [vmem:[#allocation5 + $0xc] sm:$0xf]
    %v48 = vld [vmem:[#allocation5 + $0x10] sm:$0xf]
    %v49 = vld [vmem:[#allocation5 + $0x14] sm:$0xf]
    %v50 = vld [vmem:[#allocation5 + $0x18] sm:$0xf]
    %v51 = vld [vmem:[#allocation5 + $0x1c] sm:$0xf]
    %v52 = vld [vmem:[#allocation5 + $0x20] sm:$0xf]
    %v53 = vld [vmem:[#allocation5 + $0x24] sm:$0xf]
    %v54 = vld [vmem:[#allocation5 + $0x28] sm:$0xf]
    %v55 = vld [vmem:[#allocation5 + $0x2c] sm:$0xf]
    %v56 = vld [vmem:[#allocation5 + $0x30] sm:$0xf]
    %v57 = vld [vmem:[#allocation5 + $0x34] sm:$0xf]
    %v58 = vld [vmem:[#allocation5 + $0x38] sm:$0xf]
    %v59 = vld [vmem:[#allocation5 + $0x3c] sm:$0xf]
    %v60 = vld [vmem:[%s2] sm:$0x1]
    %v61 = vunpack.c.l.bf16 %v60
    %v62 = vlaneseq
    %v63 = vshrl.u32 %v62, 7
    %v64 = vsub.s32 0, %v63
    %v65 = vrot.slane %v61, %v64
    %v82 = vunpack.c.l.b16 %v44
    %v83 = vunpack.c.l.b16 %v45
    %v84 = vunpack.c.l.b16 %v46
    %v85 = vunpack.c.l.b16 %v47
    %v86 = vunpack.c.l.b16 %v48
    %v87 = vunpack.c.l.b16 %v49
    %v88 = vunpack.c.l.b16 %v50
    %v89 = vunpack.c.l.b16 %v51
    %v90 = vunpack.c.l.b16 %v52
    %v91 = vunpack.c.l.b16 %v53
    %v92 = vunpack.c.l.b16 %v54
    %v93 = vunpack.c.l.b16 %v55
    %v94 = vunpack.c.l.b16 %v56
    %v95 = vunpack.c.l.b16 %v57
    %v96 = vunpack.c.l.b16 %v58
    %v97 = vunpack.c.l.b16 %v59
    %v98 = vpack.c.b16 %v83, %v82
    %v99 = vpack.c.b16 %v85, %v84
    %v100 = vpack.c.b16 %v87, %v86
    %v101 = vpack.c.b16 %v89, %v88
    %v102 = vpack.c.b16 %v91, %v90
    %v103 = vpack.c.b16 %v93, %v92
    %v104 = vpack.c.b16 %v95, %v94
    %v105 = vpack.c.b16 %v97, %v96
    %114 = vmatprep.subr.bf16.mxu0 0
    %115 = vmatpush1.bf16.msra.mxu0 %v98
    %116 = vmatprep.subr.bf16.mxu0 0
    %117 = vmatpush1.bf16.msra.mxu0 %v99
    %118 = vmatprep.subr.bf16.mxu0 0
    %119 = vmatpush1.bf16.msra.mxu0 %v100
    %120 = vmatprep.subr.bf16.mxu0 0
    %121 = vmatpush1.bf16.msra.mxu0 %v101
    %122 = vmatprep.subr.bf16.mxu0 0
    %123 = vmatpush1.bf16.msra.mxu0 %v102
    %124 = vmatprep.subr.bf16.mxu0 0
    %125 = vmatpush1.bf16.msra.mxu0 %v103
    %126 = vmatprep.subr.bf16.mxu0 0
    %127 = vmatpush1.bf16.msra.mxu0 %v104
    %128 = vmatprep.subr.bf16.mxu0 0
    %129 = vmatpush1.bf16.msra.mxu0 %v105
    %130 = vmatprep.subr.bf16.mxu0 0
    %131 = vmatpush1.bf16.msra.mxu0 0
    %132 = vmatprep.subr.bf16.mxu0 0
    %133 = vmatpush1.bf16.msra.mxu0 0
    %134 = vmatprep.subr.bf16.mxu0 0
    %135 = vmatpush1.bf16.msra.mxu0 0
    %136 = vmatprep.subr.bf16.mxu0 0
    %137 = vmatpush1.bf16.msra.mxu0 0
    %138 = vmatprep.subr.bf16.mxu0 0
    %139 = vmatpush1.bf16.msra.mxu0 0
    %140 = vmatprep.subr.bf16.mxu0 0
    %141 = vmatpush1.bf16.msra.mxu0 0
    %142 = vmatprep.subr.bf16.mxu0 0
    %143 = vmatpush1.bf16.msra.mxu0 0
    %144 = vmatprep.subr.bf16.mxu0 0
    %145 = vmatpush1.bf16.msra.mxu0 0
    %146 = vmatprep.mubr.bf16.mxu0 0
    %147 = vmatmul.mubr.bf16.gmra.mrb[0].mxu0 %v43
    %v148 = vpop.f32.mrb[0].mxu0
    %v149 = vadd.f32 %v65, %v148
    %v150 = vpop.f32.mrb[0].mxu0
    %v151 = vpop.f32.mrb[0].mxu0
    %v152 = vpop.f32.mrb[0].mxu0
    %153 = vdwg.mxu0
    %v154 = vpack.c.bf16 %v149, %v149
    %v155 = vunpack.c.l.bf16 %v154
    %156 = vst [vmem:[#allocation7] sm:$0xff] %v155
    // Predicated region
    $region22: #{tpu_custom_call.1} parent=1 // pred_check
      _
    $region23: #{tpu_custom_call.1} parent=1 // pred_check_branch
      %158 = sbr.rel (0) target = $region25
    $region24: #{tpu_custom_call.1} parent=1 // pred_region
      %s160 = ssub.s32 128, 128
      %161 = vsyncadd [#allocation4], %s160
      %s163 = sshll.u32 [#allocation7], 4
      %s164 = int_to_ptr.vmem [resolvable:$true] %s163
      %166 = dma.vmem_to_hbm [thread:$0]  %s164, 128, %s3, [#allocation4]
    $region25: #{tpu_custom_call.1} parent=1 // pred_fallthru
      _
    // Predicated region
    $region26: #{tpu_custom_call.1} parent=1 // pred_check
      _
    $region27: #{tpu_custom_call.1} parent=1 // pred_check_branch
      %168 = sbr.rel (0) target = $region29
    $region28: #{tpu_custom_call.1} parent=1 // pred_region
      %169 = dma.done [#allocation4], 128
    $region29: #{tpu_custom_call.1} parent=1 // pred_fallthru
      _
    %170 = vsyncpa [#allocation3], 1
    %171 = vsyncpa [#allocation6], 1
    %172 = vsyncpa [#allocation4], 1

</llo_original>
